<compile_context>
chip_gen: v6e
topology: v6e:2x2x1
jax: 0.10.0
libtpu: 0.0.40
codegen_flags: <defaults>
</compile_context>

<pallas_src>
import functools

import jax
import jax.numpy as jnp
from jax.experimental import pallas as pl
from jax.experimental.pallas import tpu as pltpu


def _lstm_kernel(gx_ref, whh_ref, out_ref, hn_ref, cn_ref):
    """One grid step == one chunk of Tc LSTM time steps.

    gx_ref : (Tc, Bp, 4H) precomputed x @ W_ih^T + b  for this chunk
    whh_ref: (H, 4H)      W_hh^T (constant across the grid)
    out_ref: (Tc, Bp, H)  per-step hidden outputs for this chunk
    hn_ref : (Bp, H)      resident carry / final h (constant block index)
    cn_ref : (Bp, H)      resident carry / final c (constant block index)
    """
    chunk = pl.program_id(0)
    Tc = gx_ref.shape[0]
    H = hn_ref.shape[-1]

    @pl.when(chunk == 0)
    def _():
        hn_ref[...] = jnp.zeros_like(hn_ref)
        cn_ref[...] = jnp.zeros_like(cn_ref)

    def step(t, carry):
        h, c = carry
        # Recurrent projection only; the x-projection was hoisted.
        gates = gx_ref[t] + jnp.dot(
            h, whh_ref[...], preferred_element_type=jnp.float32
        )  # (Bp, 4H), PyTorch gate order [i, f, g, o]

        i_g = jax.nn.sigmoid(gates[:, 0 * H:1 * H])
        f_g = jax.nn.sigmoid(gates[:, 1 * H:2 * H])
        g_g = jnp.tanh(gates[:, 2 * H:3 * H])
        o_g = jax.nn.sigmoid(gates[:, 3 * H:4 * H])

        c_new = f_g * c + i_g * g_g
        h_new = o_g * jnp.tanh(c_new)

        out_ref[t] = h_new.astype(out_ref.dtype)
        return (h_new, c_new)

    h0 = hn_ref[...]
    c0 = cn_ref[...]
    h_f, c_f = jax.lax.fori_loop(0, Tc, step, (h0, c0), unroll=(Tc <= 16))

    # Write the carry back once per chunk (not once per time step).
    hn_ref[...] = h_f.astype(hn_ref.dtype)
    cn_ref[...] = c_f.astype(cn_ref.dtype)


def _pick_time_chunk(T, cap=128):
    """Largest divisor of T that is <= cap (whole sequence if T <= cap)."""
    for d in range(min(T, cap), 0, -1):
        if T % d == 0:
            return d
    return 1


@jax.jit
def encoder_forward(x, w_ih, w_hh, b_ih, b_hh):
    """LSTM forward identical to nn.LSTM(num_layers=1, batch_first=True).

    x    : (B, T, E) float32
    w_ih : (4H, E)   PyTorch weight_ih_l0
    w_hh : (4H, H)   PyTorch weight_hh_l0
    b_ih : (4H,)     PyTorch bias_ih_l0
    b_hh : (4H,)     PyTorch bias_hh_l0
    returns: outputs (B, T, H), (h_n, c_n) each (1, B, H)
    """
    B, T, E = x.shape
    H = w_hh.shape[1]

    # Pad batch to the f32 sublane multiple (8).
    Bp = ((B + 7) // 8) * 8
    x_p = jnp.pad(x, ((0, Bp - B), (0, 0), (0, 0))) if Bp != B else x

    wih_t = jnp.transpose(w_ih, (1, 0))   # (E, 4H)
    whh_t = jnp.transpose(w_hh, (1, 0))   # (H, 4H)
    bias = b_ih + b_hh                    # (4H,)

    # Hoisted input projection: one big matmul over the whole sequence,
    # produced directly in (T, Bp, 4H) layout (no separate transpose pass).
    gates_x = (
        jnp.einsum(
            "bte,eg->tbg", x_p, wih_t, precision=jax.lax.Precision.HIGHEST
        )
        + bias
    ).astype(jnp.float32)                 # (T, Bp, 4H)

    Tc = _pick_time_chunk(T)
    grid = (T // Tc,)

    out_shapes = (
        jax.ShapeDtypeStruct((T, Bp, H), x.dtype),   # per-step outputs
        jax.ShapeDtypeStruct((Bp, H), x.dtype),      # h_n
        jax.ShapeDtypeStruct((Bp, H), x.dtype),      # c_n
    )

    outputs_tbh, h_n, c_n = pl.pallas_call(
        _lstm_kernel,
        out_shape=out_shapes,
        grid_spec=pltpu.PrefetchScalarGridSpec(
            num_scalar_prefetch=0,
            grid=grid,
            in_specs=[
                pl.BlockSpec((Tc, Bp, 4 * H), lambda c: (c, 0, 0)),
                pl.BlockSpec((H, 4 * H), lambda c: (0, 0)),
            ],
            out_specs=[
                pl.BlockSpec((Tc, Bp, H), lambda c: (c, 0, 0)),
                pl.BlockSpec((Bp, H), lambda c: (0, 0)),
                pl.BlockSpec((Bp, H), lambda c: (0, 0)),
            ],
        ),
        compiler_params=pltpu.CompilerParams(
            dimension_semantics=("arbitrary",),
        ),
    )(gates_x, whh_t)

    outputs = jnp.transpose(outputs_tbh, (1, 0, 2))[:B]   # (B, T, H)
    return outputs, (h_n[None, :B], c_n[None, :B])


def _reference_lstm(x, w_ih, w_hh, b_ih, b_hh):
    """Pure-JAX reference (lax.scan) for verification."""
    B, T, E = x.shape
    H = w_hh.shape[1]
    bias = b_ih + b_hh
    hp = jax.lax.Precision.HIGHEST

    def step(carry, x_t):
        h, c = carry
        gates = (
            jnp.dot(x_t, w_ih.T, precision=hp)
            + jnp.dot(h, w_hh.T, precision=hp)
            + bias
        )
        i = jax.nn.sigmoid(gates[:, 0 * H:1 * H])
        f = jax.nn.sigmoid(gates[:, 1 * H:2 * H])
        g = jnp.tanh(gates[:, 2 * H:3 * H])
        o = jax.nn.sigmoid(gates[:, 3 * H:4 * H])
        c_new = f * c + i * g
        h_new = o * jnp.tanh(c_new)
        return (h_new, c_new), h_new

    h0 = jnp.zeros((B, H), x.dtype)
    c0 = jnp.zeros((B, H), x.dtype)
    (h_n, c_n), ys = jax.lax.scan(step, (h0, c0), jnp.transpose(x, (1, 0, 2)))
    return jnp.transpose(ys, (1, 0, 2)), (h_n[None], c_n[None])


if __name__ == "__main__":
    # Small shapes consistent with the module's forward.
    B, T, E, H = 2, 8, 16, 32

    key = jax.random.PRNGKey(0)
    k_x, k_wih, k_whh = jax.random.split(key, 3)

    # Deterministic init matching init_weights: weights ~ U(-0.08, 0.08), biases = 0.
    wir = 0.08
    x = jax.random.normal(k_x, (B, T, E), dtype=jnp.float32)
    w_ih = jax.random.uniform(k_wih, (4 * H, E), jnp.float32, -wir, wir)
    w_hh = jax.random.uniform(k_whh, (4 * H, H), jnp.float32, -wir, wir)
    b_ih = jnp.zeros((4 * H,), jnp.float32)
    b_hh = jnp.zeros((4 * H,), jnp.float32)

    outputs, (h_n, c_n) = encoder_forward(x, w_ih, w_hh, b_ih, b_hh)
    jax.block_until_ready((outputs, h_n, c_n))

    # Verify against pure-JAX reference.
    ref_out, (ref_h, ref_c) = _reference_lstm(x, w_ih, w_hh, b_ih, b_hh)
    assert outputs.shape == (B, T, H)
    assert h_n.shape == (1, B, H) and c_n.shape == (1, B, H)
    assert jnp.allclose(outputs, ref_out, atol=1e-4)
    assert jnp.allclose(h_n, ref_h, atol=1e-4)
    assert jnp.allclose(c_n, ref_c, atol=1e-4)

    print("KERNEL_OK")
</pallas_src>

<mosaic_0001>
module attributes {stable_mosaic.version = 11 : i64} {
  func.func @_lstm_kernel(%arg0: i32, %arg1: memref<8x8x128xf32, #tpu.memory_space<vmem>>, %arg2: memref<32x128xf32, #tpu.memory_space<vmem>>, %arg3: memref<8x8x32xf32, #tpu.memory_space<vmem>>, %arg4: memref<8x32xf32, #tpu.memory_space<vmem>>, %arg5: memref<8x32xf32, #tpu.memory_space<vmem>>) attributes {dimension_semantics = [#tpu.dimension_semantics<arbitrary>], iteration_bounds = array<i64: 1>, scalar_prefetch = 0 : i64, scratch_operands = 0 : i64, tpu.core_type = #tpu.core_type<tc>, window_params = [{transform_indices = @transform_0, window_bounds = array<i64: 8, 8, 128>}, {pipeline_mode = #tpu.pipeline_mode<synchronous>, transform_indices = @transform_1, window_bounds = array<i64: 32, 128>}, {transform_indices = @transform_2, window_bounds = array<i64: 8, 8, 32>}, {pipeline_mode = #tpu.pipeline_mode<synchronous>, transform_indices = @transform_3, window_bounds = array<i64: 8, 32>}, {pipeline_mode = #tpu.pipeline_mode<synchronous>, transform_indices = @transform_4, window_bounds = array<i64: 8, 32>}]} {
    %c0_i32 = arith.constant 0 : i32
    %0 = arith.cmpi eq, %arg0, %c0_i32 : i32
    %1 = arith.extui %0 : i1 to i32
    %c0_i32_0 = arith.constant 0 : i32
    %2 = arith.cmpi ne, %1, %c0_i32_0 : i32
    scf.if %2 {
      %cst_88 = arith.constant 0.000000e+00 : f32
      %287 = vector.broadcast %cst_88 : f32 to vector<8x32xf32>
      %c0_89 = arith.constant 0 : index
      %c0_90 = arith.constant 0 : index
      %288 = vector.load %arg4[%c0_89, %c0_90] : memref<8x32xf32, #tpu.memory_space<vmem>>, vector<8x32xf32>
      tpu.vector_store %arg4[%c0_89, %c0_90], %287 {strides = array<i32>} : memref<8x32xf32, #tpu.memory_space<vmem>>, vector<8x32xf32>,
      %cst_91 = arith.constant 0.000000e+00 : f32
      %289 = vector.broadcast %cst_91 : f32 to vector<8x32xf32>
      %c0_92 = arith.constant 0 : index
      %c0_93 = arith.constant 0 : index
      %290 = vector.load %arg5[%c0_92, %c0_93] : memref<8x32xf32, #tpu.memory_space<vmem>>, vector<8x32xf32>
      tpu.vector_store %arg5[%c0_92, %c0_93], %289 {strides = array<i32>} : memref<8x32xf32, #tpu.memory_space<vmem>>, vector<8x32xf32>,
    } else {
    }
    %c0 = arith.constant 0 : index
    %c0_1 = arith.constant 0 : index
    %3 = vector.load %arg4[%c0, %c0_1] : memref<8x32xf32, #tpu.memory_space<vmem>>, vector<8x32xf32>
    %c0_2 = arith.constant 0 : index
    %c0_3 = arith.constant 0 : index
    %4 = vector.load %arg5[%c0_2, %c0_3] : memref<8x32xf32, #tpu.memory_space<vmem>>, vector<8x32xf32>
    %c0_i32_4 = arith.constant 0 : i32
    %5 = arith.index_cast %c0_i32_4 : i32 to index
    %c0_5 = arith.constant 0 : index
    %c0_6 = arith.constant 0 : index
    %6 = vector.load %arg1[%5, %c0_5, %c0_6] : memref<8x8x128xf32, #tpu.memory_space<vmem>>, vector<1x8x128xf32>
    %7 = vector.shape_cast %6 : vector<1x8x128xf32> to vector<8x128xf32>
    %c0_7 = arith.constant 0 : index
    %c0_8 = arith.constant 0 : index
    %8 = vector.load %arg2[%c0_7, %c0_8] : memref<32x128xf32, #tpu.memory_space<vmem>>, vector<32x128xf32>
    %cst = arith.constant dense<0.000000e+00> : vector<8x128xf32>
    %9 = tpu.matmul %3, %8, %cst {dimension_numbers = #tpu.dot_dimension_numbers<[1], [0], [0], [1], [0, 0, 1, 1], [], []>} : vector<8x32xf32>, vector<32x128xf32>, vector<8x128xf32> -> vector<8x128xf32>
    %10 = arith.addf %7, %9 : vector<8x128xf32>
    %11 = vector.extract_strided_slice %10 {offsets = [0, 0], sizes = [8, 32], strides = [1, 1]} : vector<8x128xf32> to vector<8x32xf32>
    %12 = arith.negf %11 : vector<8x32xf32>
    %13 = math.exp %12 : vector<8x32xf32>
    %cst_9 = arith.constant 1.000000e+00 : f32
    %14 = vector.broadcast %cst_9 : f32 to vector<8x32xf32>
    %15 = arith.addf %14, %13 : vector<8x32xf32>
    %16 = arith.divf %14, %15 : vector<8x32xf32>
    %17 = vector.extract_strided_slice %10 {offsets = [0, 32], sizes = [8, 32], strides = [1, 1]} : vector<8x128xf32> to vector<8x32xf32>
    %18 = arith.negf %17 : vector<8x32xf32>
    %19 = math.exp %18 : vector<8x32xf32>
    %cst_10 = arith.constant 1.000000e+00 : f32
    %20 = vector.broadcast %cst_10 : f32 to vector<8x32xf32>
    %21 = arith.addf %20, %19 : vector<8x32xf32>
    %22 = arith.divf %20, %21 : vector<8x32xf32>
    %23 = vector.extract_strided_slice %10 {offsets = [0, 64], sizes = [8, 32], strides = [1, 1]} : vector<8x128xf32> to vector<8x32xf32>
    %24 = math.tanh %23 : vector<8x32xf32>
    %25 = vector.extract_strided_slice %10 {offsets = [0, 96], sizes = [8, 32], strides = [1, 1]} : vector<8x128xf32> to vector<8x32xf32>
    %26 = arith.negf %25 : vector<8x32xf32>
    %27 = math.exp %26 : vector<8x32xf32>
    %cst_11 = arith.constant 1.000000e+00 : f32
    %28 = vector.broadcast %cst_11 : f32 to vector<8x32xf32>
    %29 = arith.addf %28, %27 : vector<8x32xf32>
    %30 = arith.divf %28, %29 : vector<8x32xf32>
    %31 = arith.mulf %22, %4 : vector<8x32xf32>
    %32 = arith.mulf %16, %24 : vector<8x32xf32>
    %33 = arith.addf %31, %32 : vector<8x32xf32>
    %34 = math.tanh %33 : vector<8x32xf32>
    %35 = arith.mulf %30, %34 : vector<8x32xf32>
    %36 = arith.index_cast %c0_i32_4 : i32 to index
    %c0_12 = arith.constant 0 : index
    %c0_13 = arith.constant 0 : index
    %37 = vector.load %arg3[%36, %c0_12, %c0_13] : memref<8x8x32xf32, #tpu.memory_space<vmem>>, vector<1x8x32xf32>
    %38 = vector.shape_cast %37 : vector<1x8x32xf32> to vector<8x32xf32>
    %39 = vector.shape_cast %35 : vector<8x32xf32> to vector<1x8x32xf32>
    tpu.vector_store %arg3[%36, %c0_12, %c0_13], %39 {strides = array<i32>} : memref<8x8x32xf32, #tpu.memory_space<vmem>>, vector<1x8x32xf32>,
    %c1_i32 = arith.constant 1 : i32
    %40 = arith.index_cast %c1_i32 : i32 to index
    %c0_14 = arith.constant 0 : index
    %c0_15 = arith.constant 0 : index
    %41 = vector.load %arg1[%40, %c0_14, %c0_15] : memref<8x8x128xf32, #tpu.memory_space<vmem>>, vector<1x8x128xf32>
    %42 = vector.shape_cast %41 : vector<1x8x128xf32> to vector<8x128xf32>
    %c0_16 = arith.constant 0 : index
    %c0_17 = arith.constant 0 : index
    %43 = vector.load %arg2[%c0_16, %c0_17] : memref<32x128xf32, #tpu.memory_space<vmem>>, vector<32x128xf32>
    %cst_18 = arith.constant dense<0.000000e+00> : vector<8x128xf32>
    %44 = tpu.matmul %35, %43, %cst_18 {dimension_numbers = #tpu.dot_dimension_numbers<[1], [0], [0], [1], [0, 0, 1, 1], [], []>} : vector<8x32xf32>, vector<32x128xf32>, vector<8x128xf32> -> vector<8x128xf32>
    %45 = arith.addf %42, %44 : vector<8x128xf32>
    %46 = vector.extract_strided_slice %45 {offsets = [0, 0], sizes = [8, 32], strides = [1, 1]} : vector<8x128xf32> to vector<8x32xf32>
    %47 = arith.negf %46 : vector<8x32xf32>
    %48 = math.exp %47 : vector<8x32xf32>
    %cst_19 = arith.constant 1.000000e+00 : f32
    %49 = vector.broadcast %cst_19 : f32 to vector<8x32xf32>
    %50 = arith.addf %49, %48 : vector<8x32xf32>
    %51 = arith.divf %49, %50 : vector<8x32xf32>
    %52 = vector.extract_strided_slice %45 {offsets = [0, 32], sizes = [8, 32], strides = [1, 1]} : vector<8x128xf32> to vector<8x32xf32>
    %53 = arith.negf %52 : vector<8x32xf32>
    %54 = math.exp %53 : vector<8x32xf32>
    %cst_20 = arith.constant 1.000000e+00 : f32
    %55 = vector.broadcast %cst_20 : f32 to vector<8x32xf32>
    %56 = arith.addf %55, %54 : vector<8x32xf32>
    %57 = arith.divf %55, %56 : vector<8x32xf32>
    %58 = vector.extract_strided_slice %45 {offsets = [0, 64], sizes = [8, 32], strides = [1, 1]} : vector<8x128xf32> to vector<8x32xf32>
    %59 = math.tanh %58 : vector<8x32xf32>
    %60 = vector.extract_strided_slice %45 {offsets = [0, 96], sizes = [8, 32], strides = [1, 1]} : vector<8x128xf32> to vector<8x32xf32>
    %61 = arith.negf %60 : vector<8x32xf32>
    %62 = math.exp %61 : vector<8x32xf32>
    %cst_21 = arith.constant 1.000000e+00 : f32
    %63 = vector.broadcast %cst_21 : f32 to vector<8x32xf32>
    %64 = arith.addf %63, %62 : vector<8x32xf32>
    %65 = arith.divf %63, %64 : vector<8x32xf32>
    %66 = arith.mulf %57, %33 : vector<8x32xf32>
    %67 = arith.mulf %51, %59 : vector<8x32xf32>
    %68 = arith.addf %66, %67 : vector<8x32xf32>
    %69 = math.tanh %68 : vector<8x32xf32>
    %70 = arith.mulf %65, %69 : vector<8x32xf32>
    %71 = arith.index_cast %c1_i32 : i32 to index
    %c0_22 = arith.constant 0 : index
    %c0_23 = arith.constant 0 : index
    %72 = vector.load %arg3[%71, %c0_22, %c0_23] : memref<8x8x32xf32, #tpu.memory_space<vmem>>, vector<1x8x32xf32>
    %73 = vector.shape_cast %72 : vector<1x8x32xf32> to vector<8x32xf32>
    %74 = vector.shape_cast %70 : vector<8x32xf32> to vector<1x8x32xf32>
    tpu.vector_store %arg3[%71, %c0_22, %c0_23], %74 {strides = array<i32>} : memref<8x8x32xf32, #tpu.memory_space<vmem>>, vector<1x8x32xf32>,
    %c2_i32 = arith.constant 2 : i32
    %75 = arith.index_cast %c2_i32 : i32 to index
    %c0_24 = arith.constant 0 : index
    %c0_25 = arith.constant 0 : index
    %76 = vector.load %arg1[%75, %c0_24, %c0_25] : memref<8x8x128xf32, #tpu.memory_space<vmem>>, vector<1x8x128xf32>
    %77 = vector.shape_cast %76 : vector<1x8x128xf32> to vector<8x128xf32>
    %c0_26 = arith.constant 0 : index
    %c0_27 = arith.constant 0 : index
    %78 = vector.load %arg2[%c0_26, %c0_27] : memref<32x128xf32, #tpu.memory_space<vmem>>, vector<32x128xf32>
    %cst_28 = arith.constant dense<0.000000e+00> : vector<8x128xf32>
    %79 = tpu.matmul %70, %78, %cst_28 {dimension_numbers = #tpu.dot_dimension_numbers<[1], [0], [0], [1], [0, 0, 1, 1], [], []>} : vector<8x32xf32>, vector<32x128xf32>, vector<8x128xf32> -> vector<8x128xf32>
    %80 = arith.addf %77, %79 : vector<8x128xf32>
    %81 = vector.extract_strided_slice %80 {offsets = [0, 0], sizes = [8, 32], strides = [1, 1]} : vector<8x128xf32> to vector<8x32xf32>
    %82 = arith.negf %81 : vector<8x32xf32>
    %83 = math.exp %82 : vector<8x32xf32>
    %cst_29 = arith.constant 1.000000e+00 : f32
    %84 = vector.broadcast %cst_29 : f32 to vector<8x32xf32>
    %85 = arith.addf %84, %83 : vector<8x32xf32>
    %86 = arith.divf %84, %85 : vector<8x32xf32>
    %87 = vector.extract_strided_slice %80 {offsets = [0, 32], sizes = [8, 32], strides = [1, 1]} : vector<8x128xf32> to vector<8x32xf32>
    %88 = arith.negf %87 : vector<8x32xf32>
    %89 = math.exp %88 : vector<8x32xf32>
    %cst_30 = arith.constant 1.000000e+00 : f32
    %90 = vector.broadcast %cst_30 : f32 to vector<8x32xf32>
    %91 = arith.addf %90, %89 : vector<8x32xf32>
    %92 = arith.divf %90, %91 : vector<8x32xf32>
    %93 = vector.extract_strided_slice %80 {offsets = [0, 64], sizes = [8, 32], strides = [1, 1]} : vector<8x128xf32> to vector<8x32xf32>
    %94 = math.tanh %93 : vector<8x32xf32>
    %95 = vector.extract_strided_slice %80 {offsets = [0, 96], sizes = [8, 32], strides = [1, 1]} : vector<8x128xf32> to vector<8x32xf32>
    %96 = arith.negf %95 : vector<8x32xf32>
    %97 = math.exp %96 : vector<8x32xf32>
    %cst_31 = arith.constant 1.000000e+00 : f32
    %98 = vector.broadcast %cst_31 : f32 to vector<8x32xf32>
    %99 = arith.addf %98, %97 : vector<8x32xf32>
    %100 = arith.divf %98, %99 : vector<8x32xf32>
    %101 = arith.mulf %92, %68 : vector<8x32xf32>
    %102 = arith.mulf %86, %94 : vector<8x32xf32>
    %103 = arith.addf %101, %102 : vector<8x32xf32>
    %104 = math.tanh %103 : vector<8x32xf32>
    %105 = arith.mulf %100, %104 : vector<8x32xf32>
    %106 = arith.index_cast %c2_i32 : i32 to index
    %c0_32 = arith.constant 0 : index
    %c0_33 = arith.constant 0 : index
    %107 = vector.load %arg3[%106, %c0_32, %c0_33] : memref<8x8x32xf32, #tpu.memory_space<vmem>>, vector<1x8x32xf32>
    %108 = vector.shape_cast %107 : vector<1x8x32xf32> to vector<8x32xf32>
    %109 = vector.shape_cast %105 : vector<8x32xf32> to vector<1x8x32xf32>
    tpu.vector_store %arg3[%106, %c0_32, %c0_33], %109 {strides = array<i32>} : memref<8x8x32xf32, #tpu.memory_space<vmem>>, vector<1x8x32xf32>,
    %c3_i32 = arith.constant 3 : i32
    %110 = arith.index_cast %c3_i32 : i32 to index
    %c0_34 = arith.constant 0 : index
    %c0_35 = arith.constant 0 : index
    %111 = vector.load %arg1[%110, %c0_34, %c0_35] : memref<8x8x128xf32, #tpu.memory_space<vmem>>, vector<1x8x128xf32>
    %112 = vector.shape_cast %111 : vector<1x8x128xf32> to vector<8x128xf32>
    %c0_36 = arith.constant 0 : index
    %c0_37 = arith.constant 0 : index
    %113 = vector.load %arg2[%c0_36, %c0_37] : memref<32x128xf32, #tpu.memory_space<vmem>>, vector<32x128xf32>
    %cst_38 = arith.constant dense<0.000000e+00> : vector<8x128xf32>
    %114 = tpu.matmul %105, %113, %cst_38 {dimension_numbers = #tpu.dot_dimension_numbers<[1], [0], [0], [1], [0, 0, 1, 1], [], []>} : vector<8x32xf32>, vector<32x128xf32>, vector<8x128xf32> -> vector<8x128xf32>
    %115 = arith.addf %112, %114 : vector<8x128xf32>
    %116 = vector.extract_strided_slice %115 {offsets = [0, 0], sizes = [8, 32], strides = [1, 1]} : vector<8x128xf32> to vector<8x32xf32>
    %117 = arith.negf %116 : vector<8x32xf32>
    %118 = math.exp %117 : vector<8x32xf32>
    %cst_39 = arith.constant 1.000000e+00 : f32
    %119 = vector.broadcast %cst_39 : f32 to vector<8x32xf32>
    %120 = arith.addf %119, %118 : vector<8x32xf32>
    %121 = arith.divf %119, %120 : vector<8x32xf32>
    %122 = vector.extract_strided_slice %115 {offsets = [0, 32], sizes = [8, 32], strides = [1, 1]} : vector<8x128xf32> to vector<8x32xf32>
    %123 = arith.negf %122 : vector<8x32xf32>
    %124 = math.exp %123 : vector<8x32xf32>
    %cst_40 = arith.constant 1.000000e+00 : f32
    %125 = vector.broadcast %cst_40 : f32 to vector<8x32xf32>
    %126 = arith.addf %125, %124 : vector<8x32xf32>
    %127 = arith.divf %125, %126 : vector<8x32xf32>
    %128 = vector.extract_strided_slice %115 {offsets = [0, 64], sizes = [8, 32], strides = [1, 1]} : vector<8x128xf32> to vector<8x32xf32>
    %129 = math.tanh %128 : vector<8x32xf32>
    %130 = vector.extract_strided_slice %115 {offsets = [0, 96], sizes = [8, 32], strides = [1, 1]} : vector<8x128xf32> to vector<8x32xf32>
    %131 = arith.negf %130 : vector<8x32xf32>
    %132 = math.exp %131 : vector<8x32xf32>
    %cst_41 = arith.constant 1.000000e+00 : f32
    %133 = vector.broadcast %cst_41 : f32 to vector<8x32xf32>
    %134 = arith.addf %133, %132 : vector<8x32xf32>
    %135 = arith.divf %133, %134 : vector<8x32xf32>
    %136 = arith.mulf %127, %103 : vector<8x32xf32>
    %137 = arith.mulf %121, %129 : vector<8x32xf32>
    %138 = arith.addf %136, %137 : vector<8x32xf32>
    %139 = math.tanh %138 : vector<8x32xf32>
    %140 = arith.mulf %135, %139 : vector<8x32xf32>
    %141 = arith.index_cast %c3_i32 : i32 to index
    %c0_42 = arith.constant 0 : index
    %c0_43 = arith.constant 0 : index
    %142 = vector.load %arg3[%141, %c0_42, %c0_43] : memref<8x8x32xf32, #tpu.memory_space<vmem>>, vector<1x8x32xf32>
    %143 = vector.shape_cast %142 : vector<1x8x32xf32> to vector<8x32xf32>
    %144 = vector.shape_cast %140 : vector<8x32xf32> to vector<1x8x32xf32>
    tpu.vector_store %arg3[%141, %c0_42, %c0_43], %144 {strides = array<i32>} : memref<8x8x32xf32, #tpu.memory_space<vmem>>, vector<1x8x32xf32>,
    %c4_i32 = arith.constant 4 : i32
    %145 = arith.index_cast %c4_i32 : i32 to index
    %c0_44 = arith.constant 0 : index
    %c0_45 = arith.constant 0 : index
    %146 = vector.load %arg1[%145, %c0_44, %c0_45] : memref<8x8x128xf32, #tpu.memory_space<vmem>>, vector<1x8x128xf32>
    %147 = vector.shape_cast %146 : vector<1x8x128xf32> to vector<8x128xf32>
    %c0_46 = arith.constant 0 : index
    %c0_47 = arith.constant 0 : index
    %148 = vector.load %arg2[%c0_46, %c0_47] : memref<32x128xf32, #tpu.memory_space<vmem>>, vector<32x128xf32>
    %cst_48 = arith.constant dense<0.000000e+00> : vector<8x128xf32>
    %149 = tpu.matmul %140, %148, %cst_48 {dimension_numbers = #tpu.dot_dimension_numbers<[1], [0], [0], [1], [0, 0, 1, 1], [], []>} : vector<8x32xf32>, vector<32x128xf32>, vector<8x128xf32> -> vector<8x128xf32>
    %150 = arith.addf %147, %149 : vector<8x128xf32>
    %151 = vector.extract_strided_slice %150 {offsets = [0, 0], sizes = [8, 32], strides = [1, 1]} : vector<8x128xf32> to vector<8x32xf32>
    %152 = arith.negf %151 : vector<8x32xf32>
    %153 = math.exp %152 : vector<8x32xf32>
    %cst_49 = arith.constant 1.000000e+00 : f32
    %154 = vector.broadcast %cst_49 : f32 to vector<8x32xf32>
    %155 = arith.addf %154, %153 : vector<8x32xf32>
    %156 = arith.divf %154, %155 : vector<8x32xf32>
    %157 = vector.extract_strided_slice %150 {offsets = [0, 32], sizes = [8, 32], strides = [1, 1]} : vector<8x128xf32> to vector<8x32xf32>
    %158 = arith.negf %157 : vector<8x32xf32>
    %159 = math.exp %158 : vector<8x32xf32>
    %cst_50 = arith.constant 1.000000e+00 : f32
    %160 = vector.broadcast %cst_50 : f32 to vector<8x32xf32>
    %161 = arith.addf %160, %159 : vector<8x32xf32>
    %162 = arith.divf %160, %161 : vector<8x32xf32>
    %163 = vector.extract_strided_slice %150 {offsets = [0, 64], sizes = [8, 32], strides = [1, 1]} : vector<8x128xf32> to vector<8x32xf32>
    %164 = math.tanh %163 : vector<8x32xf32>
    %165 = vector.extract_strided_slice %150 {offsets = [0, 96], sizes = [8, 32], strides = [1, 1]} : vector<8x128xf32> to vector<8x32xf32>
    %166 = arith.negf %165 : vector<8x32xf32>
    %167 = math.exp %166 : vector<8x32xf32>
    %cst_51 = arith.constant 1.000000e+00 : f32
    %168 = vector.broadcast %cst_51 : f32 to vector<8x32xf32>
    %169 = arith.addf %168, %167 : vector<8x32xf32>
    %170 = arith.divf %168, %169 : vector<8x32xf32>
    %171 = arith.mulf %162, %138 : vector<8x32xf32>
    %172 = arith.mulf %156, %164 : vector<8x32xf32>
    %173 = arith.addf %171, %172 : vector<8x32xf32>
    %174 = math.tanh %173 : vector<8x32xf32>
    %175 = arith.mulf %170, %174 : vector<8x32xf32>
    %176 = arith.index_cast %c4_i32 : i32 to index
    %c0_52 = arith.constant 0 : index
    %c0_53 = arith.constant 0 : index
    %177 = vector.load %arg3[%176, %c0_52, %c0_53] : memref<8x8x32xf32, #tpu.memory_space<vmem>>, vector<1x8x32xf32>
    %178 = vector.shape_cast %177 : vector<1x8x32xf32> to vector<8x32xf32>
    %179 = vector.shape_cast %175 : vector<8x32xf32> to vector<1x8x32xf32>
    tpu.vector_store %arg3[%176, %c0_52, %c0_53], %179 {strides = array<i32>} : memref<8x8x32xf32, #tpu.memory_space<vmem>>, vector<1x8x32xf32>,
    %c5_i32 = arith.constant 5 : i32
    %180 = arith.index_cast %c5_i32 : i32 to index
    %c0_54 = arith.constant 0 : index
    %c0_55 = arith.constant 0 : index
    %181 = vector.load %arg1[%180, %c0_54, %c0_55] : memref<8x8x128xf32, #tpu.memory_space<vmem>>, vector<1x8x128xf32>
    %182 = vector.shape_cast %181 : vector<1x8x128xf32> to vector<8x128xf32>
    %c0_56 = arith.constant 0 : index
    %c0_57 = arith.constant 0 : index
    %183 = vector.load %arg2[%c0_56, %c0_57] : memref<32x128xf32, #tpu.memory_space<vmem>>, vector<32x128xf32>
    %cst_58 = arith.constant dense<0.000000e+00> : vector<8x128xf32>
    %184 = tpu.matmul %175, %183, %cst_58 {dimension_numbers = #tpu.dot_dimension_numbers<[1], [0], [0], [1], [0, 0, 1, 1], [], []>} : vector<8x32xf32>, vector<32x128xf32>, vector<8x128xf32> -> vector<8x128xf32>
    %185 = arith.addf %182, %184 : vector<8x128xf32>
    %186 = vector.extract_strided_slice %185 {offsets = [0, 0], sizes = [8, 32], strides = [1, 1]} : vector<8x128xf32> to vector<8x32xf32>
    %187 = arith.negf %186 : vector<8x32xf32>
    %188 = math.exp %187 : vector<8x32xf32>
    %cst_59 = arith.constant 1.000000e+00 : f32
    %189 = vector.broadcast %cst_59 : f32 to vector<8x32xf32>
    %190 = arith.addf %189, %188 : vector<8x32xf32>
    %191 = arith.divf %189, %190 : vector<8x32xf32>
    %192 = vector.extract_strided_slice %185 {offsets = [0, 32], sizes = [8, 32], strides = [1, 1]} : vector<8x128xf32> to vector<8x32xf32>
    %193 = arith.negf %192 : vector<8x32xf32>
    %194 = math.exp %193 : vector<8x32xf32>
    %cst_60 = arith.constant 1.000000e+00 : f32
    %195 = vector.broadcast %cst_60 : f32 to vector<8x32xf32>
    %196 = arith.addf %195, %194 : vector<8x32xf32>
    %197 = arith.divf %195, %196 : vector<8x32xf32>
    %198 = vector.extract_strided_slice %185 {offsets = [0, 64], sizes = [8, 32], strides = [1, 1]} : vector<8x128xf32> to vector<8x32xf32>
    %199 = math.tanh %198 : vector<8x32xf32>
    %200 = vector.extract_strided_slice %185 {offsets = [0, 96], sizes = [8, 32], strides = [1, 1]} : vector<8x128xf32> to vector<8x32xf32>
    %201 = arith.negf %200 : vector<8x32xf32>
    %202 = math.exp %201 : vector<8x32xf32>
    %cst_61 = arith.constant 1.000000e+00 : f32
    %203 = vector.broadcast %cst_61 : f32 to vector<8x32xf32>
    %204 = arith.addf %203, %202 : vector<8x32xf32>
    %205 = arith.divf %203, %204 : vector<8x32xf32>
    %206 = arith.mulf %197, %173 : vector<8x32xf32>
    %207 = arith.mulf %191, %199 : vector<8x32xf32>
    %208 = arith.addf %206, %207 : vector<8x32xf32>
    %209 = math.tanh %208 : vector<8x32xf32>
    %210 = arith.mulf %205, %209 : vector<8x32xf32>
    %211 = arith.index_cast %c5_i32 : i32 to index
    %c0_62 = arith.constant 0 : index
    %c0_63 = arith.constant 0 : index
    %212 = vector.load %arg3[%211, %c0_62, %c0_63] : memref<8x8x32xf32, #tpu.memory_space<vmem>>, vector<1x8x32xf32>
    %213 = vector.shape_cast %212 : vector<1x8x32xf32> to vector<8x32xf32>
    %214 = vector.shape_cast %210 : vector<8x32xf32> to vector<1x8x32xf32>
    tpu.vector_store %arg3[%211, %c0_62, %c0_63], %214 {strides = array<i32>} : memref<8x8x32xf32, #tpu.memory_space<vmem>>, vector<1x8x32xf32>,
    %c6_i32 = arith.constant 6 : i32
    %215 = arith.index_cast %c6_i32 : i32 to index
    %c0_64 = arith.constant 0 : index
    %c0_65 = arith.constant 0 : index
    %216 = vector.load %arg1[%215, %c0_64, %c0_65] : memref<8x8x128xf32, #tpu.memory_space<vmem>>, vector<1x8x128xf32>
    %217 = vector.shape_cast %216 : vector<1x8x128xf32> to vector<8x128xf32>
    %c0_66 = arith.constant 0 : index
    %c0_67 = arith.constant 0 : index
    %218 = vector.load %arg2[%c0_66, %c0_67] : memref<32x128xf32, #tpu.memory_space<vmem>>, vector<32x128xf32>
    %cst_68 = arith.constant dense<0.000000e+00> : vector<8x128xf32>
    %219 = tpu.matmul %210, %218, %cst_68 {dimension_numbers = #tpu.dot_dimension_numbers<[1], [0], [0], [1], [0, 0, 1, 1], [], []>} : vector<8x32xf32>, vector<32x128xf32>, vector<8x128xf32> -> vector<8x128xf32>
    %220 = arith.addf %217, %219 : vector<8x128xf32>
    %221 = vector.extract_strided_slice %220 {offsets = [0, 0], sizes = [8, 32], strides = [1, 1]} : vector<8x128xf32> to vector<8x32xf32>
    %222 = arith.negf %221 : vector<8x32xf32>
    %223 = math.exp %222 : vector<8x32xf32>
    %cst_69 = arith.constant 1.000000e+00 : f32
    %224 = vector.broadcast %cst_69 : f32 to vector<8x32xf32>
    %225 = arith.addf %224, %223 : vector<8x32xf32>
    %226 = arith.divf %224, %225 : vector<8x32xf32>
    %227 = vector.extract_strided_slice %220 {offsets = [0, 32], sizes = [8, 32], strides = [1, 1]} : vector<8x128xf32> to vector<8x32xf32>
    %228 = arith.negf %227 : vector<8x32xf32>
    %229 = math.exp %228 : vector<8x32xf32>
    %cst_70 = arith.constant 1.000000e+00 : f32
    %230 = vector.broadcast %cst_70 : f32 to vector<8x32xf32>
    %231 = arith.addf %230, %229 : vector<8x32xf32>
    %232 = arith.divf %230, %231 : vector<8x32xf32>
    %233 = vector.extract_strided_slice %220 {offsets = [0, 64], sizes = [8, 32], strides = [1, 1]} : vector<8x128xf32> to vector<8x32xf32>
    %234 = math.tanh %233 : vector<8x32xf32>
    %235 = vector.extract_strided_slice %220 {offsets = [0, 96], sizes = [8, 32], strides = [1, 1]} : vector<8x128xf32> to vector<8x32xf32>
    %236 = arith.negf %235 : vector<8x32xf32>
    %237 = math.exp %236 : vector<8x32xf32>
    %cst_71 = arith.constant 1.000000e+00 : f32
    %238 = vector.broadcast %cst_71 : f32 to vector<8x32xf32>
    %239 = arith.addf %238, %237 : vector<8x32xf32>
    %240 = arith.divf %238, %239 : vector<8x32xf32>
    %241 = arith.mulf %232, %208 : vector<8x32xf32>
    %242 = arith.mulf %226, %234 : vector<8x32xf32>
    %243 = arith.addf %241, %242 : vector<8x32xf32>
    %244 = math.tanh %243 : vector<8x32xf32>
    %245 = arith.mulf %240, %244 : vector<8x32xf32>
    %246 = arith.index_cast %c6_i32 : i32 to index
    %c0_72 = arith.constant 0 : index
    %c0_73 = arith.constant 0 : index
    %247 = vector.load %arg3[%246, %c0_72, %c0_73] : memref<8x8x32xf32, #tpu.memory_space<vmem>>, vector<1x8x32xf32>
    %248 = vector.shape_cast %247 : vector<1x8x32xf32> to vector<8x32xf32>
    %249 = vector.shape_cast %245 : vector<8x32xf32> to vector<1x8x32xf32>
    tpu.vector_store %arg3[%246, %c0_72, %c0_73], %249 {strides = array<i32>} : memref<8x8x32xf32, #tpu.memory_space<vmem>>, vector<1x8x32xf32>,
    %c7_i32 = arith.constant 7 : i32
    %250 = arith.index_cast %c7_i32 : i32 to index
    %c0_74 = arith.constant 0 : index
    %c0_75 = arith.constant 0 : index
    %251 = vector.load %arg1[%250, %c0_74, %c0_75] : memref<8x8x128xf32, #tpu.memory_space<vmem>>, vector<1x8x128xf32>
    %252 = vector.shape_cast %251 : vector<1x8x128xf32> to vector<8x128xf32>
    %c0_76 = arith.constant 0 : index
    %c0_77 = arith.constant 0 : index
    %253 = vector.load %arg2[%c0_76, %c0_77] : memref<32x128xf32, #tpu.memory_space<vmem>>, vector<32x128xf32>
    %cst_78 = arith.constant dense<0.000000e+00> : vector<8x128xf32>
    %254 = tpu.matmul %245, %253, %cst_78 {dimension_numbers = #tpu.dot_dimension_numbers<[1], [0], [0], [1], [0, 0, 1, 1], [], []>} : vector<8x32xf32>, vector<32x128xf32>, vector<8x128xf32> -> vector<8x128xf32>
    %255 = arith.addf %252, %254 : vector<8x128xf32>
    %256 = vector.extract_strided_slice %255 {offsets = [0, 0], sizes = [8, 32], strides = [1, 1]} : vector<8x128xf32> to vector<8x32xf32>
    %257 = arith.negf %256 : vector<8x32xf32>
    %258 = math.exp %257 : vector<8x32xf32>
    %cst_79 = arith.constant 1.000000e+00 : f32
    %259 = vector.broadcast %cst_79 : f32 to vector<8x32xf32>
    %260 = arith.addf %259, %258 : vector<8x32xf32>
    %261 = arith.divf %259, %260 : vector<8x32xf32>
    %262 = vector.extract_strided_slice %255 {offsets = [0, 32], sizes = [8, 32], strides = [1, 1]} : vector<8x128xf32> to vector<8x32xf32>
    %263 = arith.negf %262 : vector<8x32xf32>
    %264 = math.exp %263 : vector<8x32xf32>
    %cst_80 = arith.constant 1.000000e+00 : f32
    %265 = vector.broadcast %cst_80 : f32 to vector<8x32xf32>
    %266 = arith.addf %265, %264 : vector<8x32xf32>
    %267 = arith.divf %265, %266 : vector<8x32xf32>
    %268 = vector.extract_strided_slice %255 {offsets = [0, 64], sizes = [8, 32], strides = [1, 1]} : vector<8x128xf32> to vector<8x32xf32>
    %269 = math.tanh %268 : vector<8x32xf32>
    %270 = vector.extract_strided_slice %255 {offsets = [0, 96], sizes = [8, 32], strides = [1, 1]} : vector<8x128xf32> to vector<8x32xf32>
    %271 = arith.negf %270 : vector<8x32xf32>
    %272 = math.exp %271 : vector<8x32xf32>
    %cst_81 = arith.constant 1.000000e+00 : f32
    %273 = vector.broadcast %cst_81 : f32 to vector<8x32xf32>
    %274 = arith.addf %273, %272 : vector<8x32xf32>
    %275 = arith.divf %273, %274 : vector<8x32xf32>
    %276 = arith.mulf %267, %243 : vector<8x32xf32>
    %277 = arith.mulf %261, %269 : vector<8x32xf32>
    %278 = arith.addf %276, %277 : vector<8x32xf32>
    %279 = math.tanh %278 : vector<8x32xf32>
    %280 = arith.mulf %275, %279 : vector<8x32xf32>
    %281 = arith.index_cast %c7_i32 : i32 to index
    %c0_82 = arith.constant 0 : index
    %c0_83 = arith.constant 0 : index
    %282 = vector.load %arg3[%281, %c0_82, %c0_83] : memref<8x8x32xf32, #tpu.memory_space<vmem>>, vector<1x8x32xf32>
    %283 = vector.shape_cast %282 : vector<1x8x32xf32> to vector<8x32xf32>
    %284 = vector.shape_cast %280 : vector<8x32xf32> to vector<1x8x32xf32>
    tpu.vector_store %arg3[%281, %c0_82, %c0_83], %284 {strides = array<i32>} : memref<8x8x32xf32, #tpu.memory_space<vmem>>, vector<1x8x32xf32>,
    %c8_i32 = arith.constant 8 : i32
    %c0_84 = arith.constant 0 : index
    %c0_85 = arith.constant 0 : index
    %285 = vector.load %arg4[%c0_84, %c0_85] : memref<8x32xf32, #tpu.memory_space<vmem>>, vector<8x32xf32>
    tpu.vector_store %arg4[%c0_84, %c0_85], %280 {strides = array<i32>} : memref<8x32xf32, #tpu.memory_space<vmem>>, vector<8x32xf32>,
    %c0_86 = arith.constant 0 : index
    %c0_87 = arith.constant 0 : index
    %286 = vector.load %arg5[%c0_86, %c0_87] : memref<8x32xf32, #tpu.memory_space<vmem>>, vector<8x32xf32>
    tpu.vector_store %arg5[%c0_86, %c0_87], %278 {strides = array<i32>} : memref<8x32xf32, #tpu.memory_space<vmem>>, vector<8x32xf32>,
    return
  }
  func.func @transform_0(%arg0: i32) -> (i32, i32, i32) {
    %c0_i32 = arith.constant 0 : i32
    %c0_i32_0 = arith.constant 0 : i32
    %c0_i32_1 = arith.constant 0 : i32
    return %arg0, %c0_i32, %c0_i32_0 : i32, i32, i32
  }
  func.func @transform_1(%arg0: i32) -> (i32, i32) {
    %c0_i32 = arith.constant 0 : i32
    %c0_i32_0 = arith.constant 0 : i32
    %c0_i32_1 = arith.constant 0 : i32
    return %c0_i32, %c0_i32_0 : i32, i32
  }
  func.func @transform_2(%arg0: i32) -> (i32, i32, i32) {
    %c0_i32 = arith.constant 0 : i32
    %c0_i32_0 = arith.constant 0 : i32
    %c0_i32_1 = arith.constant 0 : i32
    return %arg0, %c0_i32, %c0_i32_0 : i32, i32, i32
  }
  func.func @transform_3(%arg0: i32) -> (i32, i32) {
    %c0_i32 = arith.constant 0 : i32
    %c0_i32_0 = arith.constant 0 : i32
    %c0_i32_1 = arith.constant 0 : i32
    return %c0_i32, %c0_i32_0 : i32, i32
  }
  func.func @transform_4(%arg0: i32) -> (i32, i32) {
    %c0_i32 = arith.constant 0 : i32
    %c0_i32_0 = arith.constant 0 : i32
    %c0_i32_1 = arith.constant 0 : i32
    return %c0_i32, %c0_i32_0 : i32, i32
  }
}

</mosaic_0001>

<llo_original>
// kernel: encoder_forward.1
$region0: #{encoder_forward.1}
  #allocation0 [shape = 'u32[]', space=smem, size = 0x4, offset = 0x4, fixed_abs, tag = 'smem constant byte address 0x4 - core index']
  #allocation1 [shape = 'u32[144,128]{1,0:T(1,128)}', space=vmem, size = 0x12000, scoped, tag = 'internal scratch']
  %s0 = inlined_call_operand.vmem [shape: f32[8,8,128], index: 0, kind: input, shape index: {}]
  %s1 = inlined_call_operand.vmem [shape: f32[32,128], index: 1, kind: input, shape index: {}]
  %s2 = inlined_call_operand.vmem [shape: f32[8,8,32], index: 2, kind: output, shape index: {0}]
  %s3 = inlined_call_operand.vmem [shape: f32[8,32], index: 3, kind: output, shape index: {1}]
  %s4 = inlined_call_operand.vmem [shape: f32[8,32], index: 4, kind: output, shape index: {2}]
  %5 = xla_tuple %s2, %s3, %s4
  %s6 = sld [smem:[#allocation0]]
  $region38: #{encoder_forward.1} parent=0
    _
  %s8 = ssub.s32 1, %s6
  %s9 = scalar_select 0, %s8, %s6
  // Predicated region
  $region2: #{encoder_forward.1} parent=0 // pred_check
    _
  $region3: #{encoder_forward.1} parent=0 // pred_check_branch
    %11 = sbr.rel (0) target = $region5
  $region4: #{encoder_forward.1} parent=0 // pred_region
    _
  $region5: #{encoder_forward.1} parent=0 // pred_fallthru
    _
  // Predicated region
  $region6: #{encoder_forward.1} parent=0 // pred_check
    _
  $region7: #{encoder_forward.1} parent=0 // pred_check_branch
    %13 = sbr.rel (0) target = $region9
  $region8: #{encoder_forward.1} parent=0 // pred_region
    _
  $region9: #{encoder_forward.1} parent=0 // pred_fallthru
    _
  %p14 = scmp.eq.s32.totalorder 0, 0
  // Predicated region
  $region10: #{encoder_forward.1} parent=0 // pred_check
    %p15 = pneg %p14
  $region11: #{encoder_forward.1} parent=0 // pred_check_branch
    %17 = sbr.rel (%p15) target = $region13
  $region12: #{encoder_forward.1} parent=0 // pred_region
    %vm18 = vcmask 261120
    %19 = vst.msk [vmem:[%s3] sm:$0xff] %vm18, 0.0
    %20 = vst.msk [vmem:[%s4] sm:$0xff] %vm18, 0.0
  $region13: #{encoder_forward.1} parent=0 // pred_fallthru
    _
  %v21 = vld [vmem:[%s3] sm:$0xff]
  %v22 = vld [vmem:[%s4] sm:$0xff]
  %v23 = vld [vmem:[%s0] sm:$0xff]
  %v24 = vld [vmem:[%s1] sm:$0xff]
  %v25 = vld [vmem:[%s1 + $0x8] sm:$0xff]
  %v26 = vld [vmem:[%s1 + $0x10] sm:$0xff]
  %v27 = vld [vmem:[%s1 + $0x18] sm:$0xff]
  %vm28 = vcmask 261120
  %v30 = vsel %vm28, %v21, 0
  %32 = vmatprep.subr.mxu0 0.0
  %33 = vmatpush1.msra.mxu0 0.0
  %34 = vmatprep.subr.mxu0 0.0
  %35 = vmatpush1.msra.mxu0 0.0
  %36 = vmatprep.subr.mxu0 0.0
  %37 = vmatpush1.msra.mxu0 0.0
  %38 = vmatprep.subr.mxu0 0.0
  %39 = vmatpush1.msra.mxu0 0.0
  %40 = vmatprep.subr.mxu0 0.0
  %41 = vmatpush1.msra.mxu0 0.0
  %42 = vmatprep.subr.mxu0 0.0
  %43 = vmatpush1.msra.mxu0 0.0
  %44 = vmatprep.subr.mxu0 0.0
  %45 = vmatpush1.msra.mxu0 0.0
  %46 = vmatprep.subr.mxu0 0.0
  %47 = vmatpush1.msra.mxu0 0.0
  %48 = vmatprep.subr.mxu0 0.0
  %49 = vmatpush1.msra.mxu0 0.0
  %50 = vmatprep.subr.mxu0 0.0
  %51 = vmatpush1.msra.mxu0 0.0
  %52 = vmatprep.subr.mxu0 0.0
  %53 = vmatpush1.msra.mxu0 0.0
  %54 = vmatprep.subr.mxu0 0.0
  %55 = vmatpush1.msra.mxu0 0.0
  %56 = vmatprep.subr.mxu0 0.0
  %57 = vmatpush1.msra.mxu0 %v27
  %58 = vmatprep.subr.mxu0 0.0
  %59 = vmatpush1.msra.mxu0 %v26
  %60 = vmatprep.subr.mxu0 0.0
  %61 = vmatpush1.msra.mxu0 %v25
  %62 = vmatprep.subr.mxu0 0.0
  %63 = vmatpush1.msra.mxu0 %v24
  %64 = vmatprep.subr.mxu0 0.0
  %65 = vmatpush2.msra.mxu0 0.0
  %66 = vmatprep.subr.mxu0 0.0
  %67 = vmatpush2.msra.mxu0 0.0
  %68 = vmatprep.subr.mxu0 0.0
  %69 = vmatpush2.msra.mxu0 0.0
  %70 = vmatprep.subr.mxu0 0.0
  %71 = vmatpush2.msra.mxu0 0.0
  %72 = vmatprep.subr.mxu0 0.0
  %73 = vmatpush2.msra.mxu0 0.0
  %74 = vmatprep.subr.mxu0 0.0
  %75 = vmatpush2.msra.mxu0 0.0
  %76 = vmatprep.subr.mxu0 0.0
  %77 = vmatpush2.msra.mxu0 0.0
  %78 = vmatprep.subr.mxu0 0.0
  %79 = vmatpush2.msra.mxu0 0.0
  %80 = vmatprep.subr.mxu0 0.0
  %81 = vmatpush2.msra.mxu0 0.0
  %82 = vmatprep.subr.mxu0 0.0
  %83 = vmatpush2.msra.mxu0 0.0
  %84 = vmatprep.subr.mxu0 0.0
  %85 = vmatpush2.msra.mxu0 0.0
  %86 = vmatprep.subr.mxu0 0.0
  %87 = vmatpush2.msra.mxu0 0.0
  %88 = vmatprep.subr.mxu0 0.0
  %89 = vmatpush2.msra.mxu0 0.0
  %90 = vmatprep.subr.mxu0 0.0
  %91 = vmatpush2.msra.mxu0 0.0
  %92 = vmatprep.subr.mxu0 0.0
  %93 = vmatpush2.msra.mxu0 0.0
  %94 = vmatprep.subr.mxu0 0.0
  %95 = vmatpush2.msra.mxu0 0.0
  %96 = vmatprep.mubr.f32.mxu0 0.0
  %97 = vmatmul.mubr.f32.gmra.mxu0 %v30
  %v98 = vpop.f32.mrf.mxu0
  %v99 = vadd.f32 0.0, %v98
  %v100 = vpop.f32.mrf.mxu0
  %101 = vdwg.mxu0
  %v102 = vadd.f32 %v23, %v99
  %v103 = vxor.u32 %v102, 2147483648
  %v104 = vmul.f32 %v103, 1.442695
  %v105 = vpow.pop %v104
  %v106 = vadd.f32 %v105, 1.0
  %v107 = vrcp.pop %v106
  %v108 = vmul.f32 1.0, %v107
  %v109 = vtanh.pop %v102
  %111 = vrot.lane.b32.xlu0 %v22, 32
  %v112 = vpop.permute.xlu0 %111
  %v114 = vmul.f32 %v108, %v112
  %116 = vrot.lane.b32.xlu0 %v109, 64
  %v117 = vpop.permute.xlu0 %116
  %v119 = vmul.f32 %v108, %v117
  %121 = vrot.lane.b32.xlu0 %v119, 32
  %v122 = vpop.permute.xlu0 %121
  %v124 = vadd.f32 %v114, %v122
  %v125 = vtanh.pop %v124
  %127 = vrot.lane.b32.xlu0 %v125, 64
  %v128 = vpop.permute.xlu0 %127
  %v130 = vmul.f32 %v108, %v128
  %132 = vrot.lane.b32.xlu0 %v130, 32
  %v133 = vpop.permute.xlu0 %132
  %135 = vst.msk [vmem:[%s2] sm:$0xff] %vm28, %v133
  %s136 = scalar_lea.vmem %s0, 8
  %v137 = vld [vmem:[%s136] sm:$0xff]
  %v138 = vld [vmem:[%s1] sm:$0xff]
  %v139 = vld [vmem:[%s1 + $0x8] sm:$0xff]
  %v140 = vld [vmem:[%s1 + $0x10] sm:$0xff]
  %v141 = vld [vmem:[%s1 + $0x18] sm:$0xff]
  %v142 = vsel %vm28, %v133, 0
  %144 = vmatprep.subr.mxu0 0.0
  %145 = vmatpush1.msra.mxu0 0.0
  %146 = vmatprep.subr.mxu0 0.0
  %147 = vmatpush1.msra.mxu0 0.0
  %148 = vmatprep.subr.mxu0 0.0
  %149 = vmatpush1.msra.mxu0 0.0
  %150 = vmatprep.subr.mxu0 0.0
  %151 = vmatpush1.msra.mxu0 0.0
  %152 = vmatprep.subr.mxu0 0.0
  %153 = vmatpush1.msra.mxu0 0.0
  %154 = vmatprep.subr.mxu0 0.0
  %155 = vmatpush1.msra.mxu0 0.0
  %156 = vmatprep.subr.mxu0 0.0
  %157 = vmatpush1.msra.mxu0 0.0
  %158 = vmatprep.subr.mxu0 0.0
  %159 = vmatpush1.msra.mxu0 0.0
  %160 = vmatprep.subr.mxu0 0.0
  %161 = vmatpush1.msra.mxu0 0.0
  %162 = vmatprep.subr.mxu0 0.0
  %163 = vmatpush1.msra.mxu0 0.0
  %164 = vmatprep.subr.mxu0 0.0
  %165 = vmatpush1.msra.mxu0 0.0
  %166 = vmatprep.subr.mxu0 0.0
  %167 = vmatpush1.msra.mxu0 0.0
  %168 = vmatprep.subr.mxu0 0.0
  %169 = vmatpush1.msra.mxu0 %v141
  %170 = vmatprep.subr.mxu0 0.0
  %171 = vmatpush1.msra.mxu0 %v140
  %172 = vmatprep.subr.mxu0 0.0
  %173 = vmatpush1.msra.mxu0 %v139
  %174 = vmatprep.subr.mxu0 0.0
  %175 = vmatpush1.msra.mxu0 %v138
  %176 = vmatprep.subr.mxu0 0.0
  %177 = vmatpush2.msra.mxu0 0.0
  %178 = vmatprep.subr.mxu0 0.0
  %179 = vmatpush2.msra.mxu0 0.0
  %180 = vmatprep.subr.mxu0 0.0
  %181 = vmatpush2.msra.mxu0 0.0
  %182 = vmatprep.subr.mxu0 0.0
  %183 = vmatpush2.msra.mxu0 0.0
  %184 = vmatprep.subr.mxu0 0.0
  %185 = vmatpush2.msra.mxu0 0.0
  %186 = vmatprep.subr.mxu0 0.0
  %187 = vmatpush2.msra.mxu0 0.0
  %188 = vmatprep.subr.mxu0 0.0
  %189 = vmatpush2.msra.mxu0 0.0
  %190 = vmatprep.subr.mxu0 0.0
  %191 = vmatpush2.msra.mxu0 0.0
  %192 = vmatprep.subr.mxu0 0.0
  %193 = vmatpush2.msra.mxu0 0.0
  %194 = vmatprep.subr.mxu0 0.0
  %195 = vmatpush2.msra.mxu0 0.0
  %196 = vmatprep.subr.mxu0 0.0
  %197 = vmatpush2.msra.mxu0 0.0
  %198 = vmatprep.subr.mxu0 0.0
  %199 = vmatpush2.msra.mxu0 0.0
  %200 = vmatprep.subr.mxu0 0.0
  %201 = vmatpush2.msra.mxu0 0.0
  %202 = vmatprep.subr.mxu0 0.0
  %203 = vmatpush2.msra.mxu0 0.0
  %204 = vmatprep.subr.mxu0 0.0
  %205 = vmatpush2.msra.mxu0 0.0
  %206 = vmatprep.subr.mxu0 0.0
  %207 = vmatpush2.msra.mxu0 0.0
  %208 = vmatprep.mubr.f32.mxu0 0.0
  %209 = vmatmul.mubr.f32.gmra.mxu0 %v142
  %v210 = vpop.f32.mrf.mxu0
  %v211 = vadd.f32 0.0, %v210
  %v212 = vpop.f32.mrf.mxu0
  %213 = vdwg.mxu0
  %v214 = vadd.f32 %v137, %v211
  %v215 = vxor.u32 %v214, 2147483648
  %v216 = vmul.f32 %v215, 1.442695
  %v217 = vpow.pop %v216
  %v218 = vadd.f32 %v217, 1.0
  %v219 = vrcp.pop %v218
  %v220 = vmul.f32 1.0, %v219
  %v221 = vtanh.pop %v214
  %v222 = vmul.f32 %v220, %v124
  %224 = vrot.lane.b32.xlu0 %v221, 64
  %v225 = vpop.permute.xlu0 %224
  %v227 = vmul.f32 %v220, %v225
  %229 = vrot.lane.b32.xlu0 %v227, 32
  %v230 = vpop.permute.xlu0 %229
  %v232 = vadd.f32 %v222, %v230
  %v233 = vtanh.pop %v232
  %235 = vrot.lane.b32.xlu0 %v233, 64
  %v236 = vpop.permute.xlu0 %235
  %v238 = vmul.f32 %v220, %v236
  %240 = vrot.lane.b32.xlu0 %v238, 32
  %v241 = vpop.permute.xlu0 %240
  %s243 = scalar_lea.vmem %s2, 8
  %244 = vst.msk [vmem:[%s243] sm:$0xff] %vm28, %v241
  %s245 = scalar_lea.vmem %s0, 16
  %v246 = vld [vmem:[%s245] sm:$0xff]
  %v247 = vld [vmem:[%s1] sm:$0xff]
  %v248 = vld [vmem:[%s1 + $0x8] sm:$0xff]
  %v249 = vld [vmem:[%s1 + $0x10] sm:$0xff]
  %v250 = vld [vmem:[%s1 + $0x18] sm:$0xff]
  %v251 = vsel %vm28, %v241, 0
  %253 = vmatprep.subr.mxu0 0.0
  %254 = vmatpush1.msra.mxu0 0.0
  %255 = vmatprep.subr.mxu0 0.0
  %256 = vmatpush1.msra.mxu0 0.0
  %257 = vmatprep.subr.mxu0 0.0
  %258 = vmatpush1.msra.mxu0 0.0
  %259 = vmatprep.subr.mxu0 0.0
  %260 = vmatpush1.msra.mxu0 0.0
  %261 = vmatprep.subr.mxu0 0.0
  %262 = vmatpush1.msra.mxu0 0.0
  %263 = vmatprep.subr.mxu0 0.0
  %264 = vmatpush1.msra.mxu0 0.0
  %265 = vmatprep.subr.mxu0 0.0
  %266 = vmatpush1.msra.mxu0 0.0
  %267 = vmatprep.subr.mxu0 0.0
  %268 = vmatpush1.msra.mxu0 0.0
  %269 = vmatprep.subr.mxu0 0.0
  %270 = vmatpush1.msra.mxu0 0.0
  %271 = vmatprep.subr.mxu0 0.0
  %272 = vmatpush1.msra.mxu0 0.0
  %273 = vmatprep.subr.mxu0 0.0
  %274 = vmatpush1.msra.mxu0 0.0
  %275 = vmatprep.subr.mxu0 0.0
  %276 = vmatpush1.msra.mxu0 0.0
  %277 = vmatprep.subr.mxu0 0.0
  %278 = vmatpush1.msra.mxu0 %v250
  %279 = vmatprep.subr.mxu0 0.0
  %280 = vmatpush1.msra.mxu0 %v249
  %281 = vmatprep.subr.mxu0 0.0
  %282 = vmatpush1.msra.mxu0 %v248
  %283 = vmatprep.subr.mxu0 0.0
  %284 = vmatpush1.msra.mxu0 %v247
  %285 = vmatprep.subr.mxu0 0.0
  %286 = vmatpush2.msra.mxu0 0.0
  %287 = vmatprep.subr.mxu0 0.0
  %288 = vmatpush2.msra.mxu0 0.0
  %289 = vmatprep.subr.mxu0 0.0
  %290 = vmatpush2.msra.mxu0 0.0
  %291 = vmatprep.subr.mxu0 0.0
  %292 = vmatpush2.msra.mxu0 0.0
  %293 = vmatprep.subr.mxu0 0.0
  %294 = vmatpush2.msra.mxu0 0.0
  %295 = vmatprep.subr.mxu0 0.0
  %296 = vmatpush2.msra.mxu0 0.0
  %297 = vmatprep.subr.mxu0 0.0
  %298 = vmatpush2.msra.mxu0 0.0
  %299 = vmatprep.subr.mxu0 0.0
  %300 = vmatpush2.msra.mxu0 0.0
  %301 = vmatprep.subr.mxu0 0.0
  %302 = vmatpush2.msra.mxu0 0.0
  %303 = vmatprep.subr.mxu0 0.0
  %304 = vmatpush2.msra.mxu0 0.0
  %305 = vmatprep.subr.mxu0 0.0
  %306 = vmatpush2.msra.mxu0 0.0
  %307 = vmatprep.subr.mxu0 0.0
  %308 = vmatpush2.msra.mxu0 0.0
  %309 = vmatprep.subr.mxu0 0.0
  %310 = vmatpush2.msra.mxu0 0.0
  %311 = vmatprep.subr.mxu0 0.0
  %312 = vmatpush2.msra.mxu0 0.0
  %313 = vmatprep.subr.mxu0 0.0
  %314 = vmatpush2.msra.mxu0 0.0
  %315 = vmatprep.subr.mxu0 0.0
  %316 = vmatpush2.msra.mxu0 0.0
  %317 = vmatprep.mubr.f32.mxu0 0.0
  %318 = vmatmul.mubr.f32.gmra.mxu0 %v251
  %v319 = vpop.f32.mrf.mxu0
  %v320 = vadd.f32 0.0, %v319
  %v321 = vpop.f32.mrf.mxu0
  %322 = vdwg.mxu0
  %v323 = vadd.f32 %v246, %v320
  %v324 = vxor.u32 %v323, 2147483648
  %v325 = vmul.f32 %v324, 1.442695
  %v326 = vpow.pop %v325
  %v327 = vadd.f32 %v326, 1.0
  %v328 = vrcp.pop %v327
  %v329 = vmul.f32 1.0, %v328
  %v330 = vtanh.pop %v323
  %v331 = vmul.f32 %v329, %v232
  %333 = vrot.lane.b32.xlu0 %v330, 64
  %v334 = vpop.permute.xlu0 %333
  %v336 = vmul.f32 %v329, %v334
  %338 = vrot.lane.b32.xlu0 %v336, 32
  %v339 = vpop.permute.xlu0 %338
  %v341 = vadd.f32 %v331, %v339
  %v342 = vtanh.pop %v341
  %344 = vrot.lane.b32.xlu0 %v342, 64
  %v345 = vpop.permute.xlu0 %344
  %v347 = vmul.f32 %v329, %v345
  %349 = vrot.lane.b32.xlu0 %v347, 32
  %v350 = vpop.permute.xlu0 %349
  %s352 = scalar_lea.vmem %s2, 16
  %353 = vst.msk [vmem:[%s352] sm:$0xff] %vm28, %v350
  %s354 = scalar_lea.vmem %s0, 24
  %v355 = vld [vmem:[%s354] sm:$0xff]
  %v356 = vld [vmem:[%s1] sm:$0xff]
  %v357 = vld [vmem:[%s1 + $0x8] sm:$0xff]
  %v358 = vld [vmem:[%s1 + $0x10] sm:$0xff]
  %v359 = vld [vmem:[%s1 + $0x18] sm:$0xff]
  %v360 = vsel %vm28, %v350, 0
  %362 = vmatprep.subr.mxu0 0.0
  %363 = vmatpush1.msra.mxu0 0.0
  %364 = vmatprep.subr.mxu0 0.0
  %365 = vmatpush1.msra.mxu0 0.0
  %366 = vmatprep.subr.mxu0 0.0
  %367 = vmatpush1.msra.mxu0 0.0
  %368 = vmatprep.subr.mxu0 0.0
  %369 = vmatpush1.msra.mxu0 0.0
  %370 = vmatprep.subr.mxu0 0.0
  %371 = vmatpush1.msra.mxu0 0.0
  %372 = vmatprep.subr.mxu0 0.0
  %373 = vmatpush1.msra.mxu0 0.0
  %374 = vmatprep.subr.mxu0 0.0
  %375 = vmatpush1.msra.mxu0 0.0
  %376 = vmatprep.subr.mxu0 0.0
  %377 = vmatpush1.msra.mxu0 0.0
  %378 = vmatprep.subr.mxu0 0.0
  %379 = vmatpush1.msra.mxu0 0.0
  %380 = vmatprep.subr.mxu0 0.0
  %381 = vmatpush1.msra.mxu0 0.0
  %382 = vmatprep.subr.mxu0 0.0
  %383 = vmatpush1.msra.mxu0 0.0
  %384 = vmatprep.subr.mxu0 0.0
  %385 = vmatpush1.msra.mxu0 0.0
  %386 = vmatprep.subr.mxu0 0.0
  %387 = vmatpush1.msra.mxu0 %v359
  %388 = vmatprep.subr.mxu0 0.0
  %389 = vmatpush1.msra.mxu0 %v358
  %390 = vmatprep.subr.mxu0 0.0
  %391 = vmatpush1.msra.mxu0 %v357
  %392 = vmatprep.subr.mxu0 0.0
  %393 = vmatpush1.msra.mxu0 %v356
  %394 = vmatprep.subr.mxu0 0.0
  %395 = vmatpush2.msra.mxu0 0.0
  %396 = vmatprep.subr.mxu0 0.0
  %397 = vmatpush2.msra.mxu0 0.0
  %398 = vmatprep.subr.mxu0 0.0
  %399 = vmatpush2.msra.mxu0 0.0
  %400 = vmatprep.subr.mxu0 0.0
  %401 = vmatpush2.msra.mxu0 0.0
  %402 = vmatprep.subr.mxu0 0.0
  %403 = vmatpush2.msra.mxu0 0.0
  %404 = vmatprep.subr.mxu0 0.0
  %405 = vmatpush2.msra.mxu0 0.0
  %406 = vmatprep.subr.mxu0 0.0
  %407 = vmatpush2.msra.mxu0 0.0
  %408 = vmatprep.subr.mxu0 0.0
  %409 = vmatpush2.msra.mxu0 0.0
  %410 = vmatprep.subr.mxu0 0.0
  %411 = vmatpush2.msra.mxu0 0.0
  %412 = vmatprep.subr.mxu0 0.0
  %413 = vmatpush2.msra.mxu0 0.0
  %414 = vmatprep.subr.mxu0 0.0
  %415 = vmatpush2.msra.mxu0 0.0
  %416 = vmatprep.subr.mxu0 0.0
  %417 = vmatpush2.msra.mxu0 0.0
  %418 = vmatprep.subr.mxu0 0.0
  %419 = vmatpush2.msra.mxu0 0.0
  %420 = vmatprep.subr.mxu0 0.0
  %421 = vmatpush2.msra.mxu0 0.0
  %422 = vmatprep.subr.mxu0 0.0
  %423 = vmatpush2.msra.mxu0 0.0
  %424 = vmatprep.subr.mxu0 0.0
  %425 = vmatpush2.msra.mxu0 0.0
  %426 = vmatprep.mubr.f32.mxu0 0.0
  %427 = vmatmul.mubr.f32.gmra.mxu0 %v360
  %v428 = vpop.f32.mrf.mxu0
  %v429 = vadd.f32 0.0, %v428
  %v430 = vpop.f32.mrf.mxu0
  %431 = vdwg.mxu0
  %v432 = vadd.f32 %v355, %v429
  %v433 = vxor.u32 %v432, 2147483648
  %v434 = vmul.f32 %v433, 1.442695
  %v435 = vpow.pop %v434
  %v436 = vadd.f32 %v435, 1.0
  %v437 = vrcp.pop %v436
  %v438 = vmul.f32 1.0, %v437
  %v439 = vtanh.pop %v432
  %v440 = vmul.f32 %v438, %v341
  %442 = vrot.lane.b32.xlu0 %v439, 64
  %v443 = vpop.permute.xlu0 %442
  %v445 = vmul.f32 %v438, %v443
  %447 = vrot.lane.b32.xlu0 %v445, 32
  %v448 = vpop.permute.xlu0 %447
  %v450 = vadd.f32 %v440, %v448
  %v451 = vtanh.pop %v450
  %453 = vrot.lane.b32.xlu0 %v451, 64
  %v454 = vpop.permute.xlu0 %453
  %v456 = vmul.f32 %v438, %v454
  %458 = vrot.lane.b32.xlu0 %v456, 32
  %v459 = vpop.permute.xlu0 %458
  %s461 = scalar_lea.vmem %s2, 24
  %462 = vst.msk [vmem:[%s461] sm:$0xff] %vm28, %v459
  %s463 = scalar_lea.vmem %s0, 32
  %v464 = vld [vmem:[%s463] sm:$0xff]
  %v465 = vld [vmem:[%s1] sm:$0xff]
  %v466 = vld [vmem:[%s1 + $0x8] sm:$0xff]
  %v467 = vld [vmem:[%s1 + $0x10] sm:$0xff]
  %v468 = vld [vmem:[%s1 + $0x18] sm:$0xff]
  %v469 = vsel %vm28, %v459, 0
  %471 = vmatprep.subr.mxu0 0.0
  %472 = vmatpush1.msra.mxu0 0.0
  %473 = vmatprep.subr.mxu0 0.0
  %474 = vmatpush1.msra.mxu0 0.0
  %475 = vmatprep.subr.mxu0 0.0
  %476 = vmatpush1.msra.mxu0 0.0
  %477 = vmatprep.subr.mxu0 0.0
  %478 = vmatpush1.msra.mxu0 0.0
  %479 = vmatprep.subr.mxu0 0.0
  %480 = vmatpush1.msra.mxu0 0.0
  %481 = vmatprep.subr.mxu0 0.0
  %482 = vmatpush1.msra.mxu0 0.0
  %483 = vmatprep.subr.mxu0 0.0
  %484 = vmatpush1.msra.mxu0 0.0
  %485 = vmatprep.subr.mxu0 0.0
  %486 = vmatpush1.msra.mxu0 0.0
  %487 = vmatprep.subr.mxu0 0.0
  %488 = vmatpush1.msra.mxu0 0.0
  %489 = vmatprep.subr.mxu0 0.0
  %490 = vmatpush1.msra.mxu0 0.0
  %491 = vmatprep.subr.mxu0 0.0
  %492 = vmatpush1.msra.mxu0 0.0
  %493 = vmatprep.subr.mxu0 0.0
  %494 = vmatpush1.msra.mxu0 0.0
  %495 = vmatprep.subr.mxu0 0.0
  %496 = vmatpush1.msra.mxu0 %v468
  %497 = vmatprep.subr.mxu0 0.0
  %498 = vmatpush1.msra.mxu0 %v467
  %499 = vmatprep.subr.mxu0 0.0
  %500 = vmatpush1.msra.mxu0 %v466
  %501 = vmatprep.subr.mxu0 0.0
  %502 = vmatpush1.msra.mxu0 %v465
  %503 = vmatprep.subr.mxu0 0.0
  %504 = vmatpush2.msra.mxu0 0.0
  %505 = vmatprep.subr.mxu0 0.0
  %506 = vmatpush2.msra.mxu0 0.0
  %507 = vmatprep.subr.mxu0 0.0
  %508 = vmatpush2.msra.mxu0 0.0
  %509 = vmatprep.subr.mxu0 0.0
  %510 = vmatpush2.msra.mxu0 0.0
  %511 = vmatprep.subr.mxu0 0.0
  %512 = vmatpush2.msra.mxu0 0.0
  %513 = vmatprep.subr.mxu0 0.0
  %514 = vmatpush2.msra.mxu0 0.0
  %515 = vmatprep.subr.mxu0 0.0
  %516 = vmatpush2.msra.mxu0 0.0
  %517 = vmatprep.subr.mxu0 0.0
  %518 = vmatpush2.msra.mxu0 0.0
  %519 = vmatprep.subr.mxu0 0.0
  %520 = vmatpush2.msra.mxu0 0.0
  %521 = vmatprep.subr.mxu0 0.0
  %522 = vmatpush2.msra.mxu0 0.0
  %523 = vmatprep.subr.mxu0 0.0
  %524 = vmatpush2.msra.mxu0 0.0
  %525 = vmatprep.subr.mxu0 0.0
  %526 = vmatpush2.msra.mxu0 0.0
  %527 = vmatprep.subr.mxu0 0.0
  %528 = vmatpush2.msra.mxu0 0.0
  %529 = vmatprep.subr.mxu0 0.0
  %530 = vmatpush2.msra.mxu0 0.0
  %531 = vmatprep.subr.mxu0 0.0
  %532 = vmatpush2.msra.mxu0 0.0
  %533 = vmatprep.subr.mxu0 0.0
  %534 = vmatpush2.msra.mxu0 0.0
  %535 = vmatprep.mubr.f32.mxu0 0.0
  %536 = vmatmul.mubr.f32.gmra.mxu0 %v469
  %v537 = vpop.f32.mrf.mxu0
  %v538 = vadd.f32 0.0, %v537
  %v539 = vpop.f32.mrf.mxu0
  %540 = vdwg.mxu0
  %v541 = vadd.f32 %v464, %v538
  %v542 = vxor.u32 %v541, 2147483648
  %v543 = vmul.f32 %v542, 1.442695
  %v544 = vpow.pop %v543
  %v545 = vadd.f32 %v544, 1.0
  %v546 = vrcp.pop %v545
  %v547 = vmul.f32 1.0, %v546
  %v548 = vtanh.pop %v541
  %v549 = vmul.f32 %v547, %v450
  %551 = vrot.lane.b32.xlu0 %v548, 64
  %v552 = vpop.permute.xlu0 %551
  %v554 = vmul.f32 %v547, %v552
  %556 = vrot.lane.b32.xlu0 %v554, 32
  %v557 = vpop.permute.xlu0 %556
  %v559 = vadd.f32 %v549, %v557
  %v560 = vtanh.pop %v559
  %562 = vrot.lane.b32.xlu0 %v560, 64
  %v563 = vpop.permute.xlu0 %562
  %v565 = vmul.f32 %v547, %v563
  %567 = vrot.lane.b32.xlu0 %v565, 32
  %v568 = vpop.permute.xlu0 %567
  %s570 = scalar_lea.vmem %s2, 32
  %571 = vst.msk [vmem:[%s570] sm:$0xff] %vm28, %v568
  %s572 = scalar_lea.vmem %s0, 40
  %v573 = vld [vmem:[%s572] sm:$0xff]
  %v574 = vld [vmem:[%s1] sm:$0xff]
  %v575 = vld [vmem:[%s1 + $0x8] sm:$0xff]
  %v576 = vld [vmem:[%s1 + $0x10] sm:$0xff]
  %v577 = vld [vmem:[%s1 + $0x18] sm:$0xff]
  %v578 = vsel %vm28, %v568, 0
  %580 = vmatprep.subr.mxu0 0.0
  %581 = vmatpush1.msra.mxu0 0.0
  %582 = vmatprep.subr.mxu0 0.0
  %583 = vmatpush1.msra.mxu0 0.0
  %584 = vmatprep.subr.mxu0 0.0
  %585 = vmatpush1.msra.mxu0 0.0
  %586 = vmatprep.subr.mxu0 0.0
  %587 = vmatpush1.msra.mxu0 0.0
  %588 = vmatprep.subr.mxu0 0.0
  %589 = vmatpush1.msra.mxu0 0.0
  %590 = vmatprep.subr.mxu0 0.0
  %591 = vmatpush1.msra.mxu0 0.0
  %592 = vmatprep.subr.mxu0 0.0
  %593 = vmatpush1.msra.mxu0 0.0
  %594 = vmatprep.subr.mxu0 0.0
  %595 = vmatpush1.msra.mxu0 0.0
  %596 = vmatprep.subr.mxu0 0.0
  %597 = vmatpush1.msra.mxu0 0.0
  %598 = vmatprep.subr.mxu0 0.0
  %599 = vmatpush1.msra.mxu0 0.0
  %600 = vmatprep.subr.mxu0 0.0
  %601 = vmatpush1.msra.mxu0 0.0
  %602 = vmatprep.subr.mxu0 0.0
  %603 = vmatpush1.msra.mxu0 0.0
  %604 = vmatprep.subr.mxu0 0.0
  %605 = vmatpush1.msra.mxu0 %v577
  %606 = vmatprep.subr.mxu0 0.0
  %607 = vmatpush1.msra.mxu0 %v576
  %608 = vmatprep.subr.mxu0 0.0
  %609 = vmatpush1.msra.mxu0 %v575
  %610 = vmatprep.subr.mxu0 0.0
  %611 = vmatpush1.msra.mxu0 %v574
  %612 = vmatprep.subr.mxu0 0.0
  %613 = vmatpush2.msra.mxu0 0.0
  %614 = vmatprep.subr.mxu0 0.0
  %615 = vmatpush2.msra.mxu0 0.0
  %616 = vmatprep.subr.mxu0 0.0
  %617 = vmatpush2.msra.mxu0 0.0
  %618 = vmatprep.subr.mxu0 0.0
  %619 = vmatpush2.msra.mxu0 0.0
  %620 = vmatprep.subr.mxu0 0.0
  %621 = vmatpush2.msra.mxu0 0.0
  %622 = vmatprep.subr.mxu0 0.0
  %623 = vmatpush2.msra.mxu0 0.0
  %624 = vmatprep.subr.mxu0 0.0
  %625 = vmatpush2.msra.mxu0 0.0
  %626 = vmatprep.subr.mxu0 0.0
  %627 = vmatpush2.msra.mxu0 0.0
  %628 = vmatprep.subr.mxu0 0.0
  %629 = vmatpush2.msra.mxu0 0.0
  %630 = vmatprep.subr.mxu0 0.0
  %631 = vmatpush2.msra.mxu0 0.0
  %632 = vmatprep.subr.mxu0 0.0
  %633 = vmatpush2.msra.mxu0 0.0
  %634 = vmatprep.subr.mxu0 0.0
  %635 = vmatpush2.msra.mxu0 0.0
  %636 = vmatprep.subr.mxu0 0.0
  %637 = vmatpush2.msra.mxu0 0.0
  %638 = vmatprep.subr.mxu0 0.0
  %639 = vmatpush2.msra.mxu0 0.0
  %640 = vmatprep.subr.mxu0 0.0
  %641 = vmatpush2.msra.mxu0 0.0
  %642 = vmatprep.subr.mxu0 0.0
  %643 = vmatpush2.msra.mxu0 0.0
  %644 = vmatprep.mubr.f32.mxu0 0.0
  %645 = vmatmul.mubr.f32.gmra.mxu0 %v578
  %v646 = vpop.f32.mrf.mxu0
  %v647 = vadd.f32 0.0, %v646
  %v648 = vpop.f32.mrf.mxu0
  %649 = vdwg.mxu0
  %v650 = vadd.f32 %v573, %v647
  %v651 = vxor.u32 %v650, 2147483648
  %v652 = vmul.f32 %v651, 1.442695
  %v653 = vpow.pop %v652
  %v654 = vadd.f32 %v653, 1.0
  %v655 = vrcp.pop %v654
  %v656 = vmul.f32 1.0, %v655
  %v657 = vtanh.pop %v650
  %v658 = vmul.f32 %v656, %v559
  %660 = vrot.lane.b32.xlu0 %v657, 64
  %v661 = vpop.permute.xlu0 %660
  %v663 = vmul.f32 %v656, %v661
  %665 = vrot.lane.b32.xlu0 %v663, 32
  %v666 = vpop.permute.xlu0 %665
  %v668 = vadd.f32 %v658, %v666
  %v669 = vtanh.pop %v668
  %671 = vrot.lane.b32.xlu0 %v669, 64
  %v672 = vpop.permute.xlu0 %671
  %v674 = vmul.f32 %v656, %v672
  %676 = vrot.lane.b32.xlu0 %v674, 32
  %v677 = vpop.permute.xlu0 %676
  %s679 = scalar_lea.vmem %s2, 40
  %680 = vst.msk [vmem:[%s679] sm:$0xff] %vm28, %v677
  %s681 = scalar_lea.vmem %s0, 48
  %v682 = vld [vmem:[%s681] sm:$0xff]
  %v683 = vld [vmem:[%s1] sm:$0xff]
  %v684 = vld [vmem:[%s1 + $0x8] sm:$0xff]
  %v685 = vld [vmem:[%s1 + $0x10] sm:$0xff]
  %v686 = vld [vmem:[%s1 + $0x18] sm:$0xff]
  %v687 = vsel %vm28, %v677, 0
  %689 = vmatprep.subr.mxu0 0.0
  %690 = vmatpush1.msra.mxu0 0.0
  %691 = vmatprep.subr.mxu0 0.0
  %692 = vmatpush1.msra.mxu0 0.0
  %693 = vmatprep.subr.mxu0 0.0
  %694 = vmatpush1.msra.mxu0 0.0
  %695 = vmatprep.subr.mxu0 0.0
  %696 = vmatpush1.msra.mxu0 0.0
  %697 = vmatprep.subr.mxu0 0.0
  %698 = vmatpush1.msra.mxu0 0.0
  %699 = vmatprep.subr.mxu0 0.0
  %700 = vmatpush1.msra.mxu0 0.0
  %701 = vmatprep.subr.mxu0 0.0
  %702 = vmatpush1.msra.mxu0 0.0
  %703 = vmatprep.subr.mxu0 0.0
  %704 = vmatpush1.msra.mxu0 0.0
  %705 = vmatprep.subr.mxu0 0.0
  %706 = vmatpush1.msra.mxu0 0.0
  %707 = vmatprep.subr.mxu0 0.0
  %708 = vmatpush1.msra.mxu0 0.0
  %709 = vmatprep.subr.mxu0 0.0
  %710 = vmatpush1.msra.mxu0 0.0
  %711 = vmatprep.subr.mxu0 0.0
  %712 = vmatpush1.msra.mxu0 0.0
  %713 = vmatprep.subr.mxu0 0.0
  %714 = vmatpush1.msra.mxu0 %v686
  %715 = vmatprep.subr.mxu0 0.0
  %716 = vmatpush1.msra.mxu0 %v685
  %717 = vmatprep.subr.mxu0 0.0
  %718 = vmatpush1.msra.mxu0 %v684
  %719 = vmatprep.subr.mxu0 0.0
  %720 = vmatpush1.msra.mxu0 %v683
  %721 = vmatprep.subr.mxu0 0.0
  %722 = vmatpush2.msra.mxu0 0.0
  %723 = vmatprep.subr.mxu0 0.0
  %724 = vmatpush2.msra.mxu0 0.0
  %725 = vmatprep.subr.mxu0 0.0
  %726 = vmatpush2.msra.mxu0 0.0
  %727 = vmatprep.subr.mxu0 0.0
  %728 = vmatpush2.msra.mxu0 0.0
  %729 = vmatprep.subr.mxu0 0.0
  %730 = vmatpush2.msra.mxu0 0.0
  %731 = vmatprep.subr.mxu0 0.0
  %732 = vmatpush2.msra.mxu0 0.0
  %733 = vmatprep.subr.mxu0 0.0
  %734 = vmatpush2.msra.mxu0 0.0
  %735 = vmatprep.subr.mxu0 0.0
  %736 = vmatpush2.msra.mxu0 0.0
  %737 = vmatprep.subr.mxu0 0.0
  %738 = vmatpush2.msra.mxu0 0.0
  %739 = vmatprep.subr.mxu0 0.0
  %740 = vmatpush2.msra.mxu0 0.0
  %741 = vmatprep.subr.mxu0 0.0
  %742 = vmatpush2.msra.mxu0 0.0
  %743 = vmatprep.subr.mxu0 0.0
  %744 = vmatpush2.msra.mxu0 0.0
  %745 = vmatprep.subr.mxu0 0.0
  %746 = vmatpush2.msra.mxu0 0.0
  %747 = vmatprep.subr.mxu0 0.0
  %748 = vmatpush2.msra.mxu0 0.0
  %749 = vmatprep.subr.mxu0 0.0
  %750 = vmatpush2.msra.mxu0 0.0
  %751 = vmatprep.subr.mxu0 0.0
  %752 = vmatpush2.msra.mxu0 0.0
  %753 = vmatprep.mubr.f32.mxu0 0.0
  %754 = vmatmul.mubr.f32.gmra.mxu0 %v687
  %v755 = vpop.f32.mrf.mxu0
  %v756 = vadd.f32 0.0, %v755
  %v757 = vpop.f32.mrf.mxu0
  %758 = vdwg.mxu0
  %v759 = vadd.f32 %v682, %v756
  %v760 = vxor.u32 %v759, 2147483648
  %v761 = vmul.f32 %v760, 1.442695
  %v762 = vpow.pop %v761
  %v763 = vadd.f32 %v762, 1.0
  %v764 = vrcp.pop %v763
  %v765 = vmul.f32 1.0, %v764
  %v766 = vtanh.pop %v759
  %v767 = vmul.f32 %v765, %v668
  %769 = vrot.lane.b32.xlu0 %v766, 64
  %v770 = vpop.permute.xlu0 %769
  %v772 = vmul.f32 %v765, %v770
  %774 = vrot.lane.b32.xlu0 %v772, 32
  %v775 = vpop.permute.xlu0 %774
  %v777 = vadd.f32 %v767, %v775
  %v778 = vtanh.pop %v777
  %780 = vrot.lane.b32.xlu0 %v778, 64
  %v781 = vpop.permute.xlu0 %780
  %v783 = vmul.f32 %v765, %v781
  %785 = vrot.lane.b32.xlu0 %v783, 32
  %v786 = vpop.permute.xlu0 %785
  %s788 = scalar_lea.vmem %s2, 48
  %789 = vst.msk [vmem:[%s788] sm:$0xff] %vm28, %v786
  %s790 = scalar_lea.vmem %s0, 56
  %v791 = vld [vmem:[%s790] sm:$0xff]
  %v792 = vld [vmem:[%s1] sm:$0xff]
  %v793 = vld [vmem:[%s1 + $0x8] sm:$0xff]
  %v794 = vld [vmem:[%s1 + $0x10] sm:$0xff]
  %v795 = vld [vmem:[%s1 + $0x18] sm:$0xff]
  %v796 = vsel %vm28, %v786, 0
  %798 = vmatprep.subr.mxu0 0.0
  %799 = vmatpush1.msra.mxu0 0.0
  %800 = vmatprep.subr.mxu0 0.0
  %801 = vmatpush1.msra.mxu0 0.0
  %802 = vmatprep.subr.mxu0 0.0
  %803 = vmatpush1.msra.mxu0 0.0
  %804 = vmatprep.subr.mxu0 0.0
  %805 = vmatpush1.msra.mxu0 0.0
  %806 = vmatprep.subr.mxu0 0.0
  %807 = vmatpush1.msra.mxu0 0.0
  %808 = vmatprep.subr.mxu0 0.0
  %809 = vmatpush1.msra.mxu0 0.0
  %810 = vmatprep.subr.mxu0 0.0
  %811 = vmatpush1.msra.mxu0 0.0
  %812 = vmatprep.subr.mxu0 0.0
  %813 = vmatpush1.msra.mxu0 0.0
  %814 = vmatprep.subr.mxu0 0.0
  %815 = vmatpush1.msra.mxu0 0.0
  %816 = vmatprep.subr.mxu0 0.0
  %817 = vmatpush1.msra.mxu0 0.0
  %818 = vmatprep.subr.mxu0 0.0
  %819 = vmatpush1.msra.mxu0 0.0
  %820 = vmatprep.subr.mxu0 0.0
  %821 = vmatpush1.msra.mxu0 0.0
  %822 = vmatprep.subr.mxu0 0.0
  %823 = vmatpush1.msra.mxu0 %v795
  %824 = vmatprep.subr.mxu0 0.0
  %825 = vmatpush1.msra.mxu0 %v794
  %826 = vmatprep.subr.mxu0 0.0
  %827 = vmatpush1.msra.mxu0 %v793
  %828 = vmatprep.subr.mxu0 0.0
  %829 = vmatpush1.msra.mxu0 %v792
  %830 = vmatprep.subr.mxu0 0.0
  %831 = vmatpush2.msra.mxu0 0.0
  %832 = vmatprep.subr.mxu0 0.0
  %833 = vmatpush2.msra.mxu0 0.0
  %834 = vmatprep.subr.mxu0 0.0
  %835 = vmatpush2.msra.mxu0 0.0
  %836 = vmatprep.subr.mxu0 0.0
  %837 = vmatpush2.msra.mxu0 0.0
  %838 = vmatprep.subr.mxu0 0.0
  %839 = vmatpush2.msra.mxu0 0.0
  %840 = vmatprep.subr.mxu0 0.0
  %841 = vmatpush2.msra.mxu0 0.0
  %842 = vmatprep.subr.mxu0 0.0
  %843 = vmatpush2.msra.mxu0 0.0
  %844 = vmatprep.subr.mxu0 0.0
  %845 = vmatpush2.msra.mxu0 0.0
  %846 = vmatprep.subr.mxu0 0.0
  %847 = vmatpush2.msra.mxu0 0.0
  %848 = vmatprep.subr.mxu0 0.0
  %849 = vmatpush2.msra.mxu0 0.0
  %850 = vmatprep.subr.mxu0 0.0
  %851 = vmatpush2.msra.mxu0 0.0
  %852 = vmatprep.subr.mxu0 0.0
  %853 = vmatpush2.msra.mxu0 0.0
  %854 = vmatprep.subr.mxu0 0.0
  %855 = vmatpush2.msra.mxu0 0.0
  %856 = vmatprep.subr.mxu0 0.0
  %857 = vmatpush2.msra.mxu0 0.0
  %858 = vmatprep.subr.mxu0 0.0
  %859 = vmatpush2.msra.mxu0 0.0
  %860 = vmatprep.subr.mxu0 0.0
  %861 = vmatpush2.msra.mxu0 0.0
  %862 = vmatprep.mubr.f32.mxu0 0.0
  %863 = vmatmul.mubr.f32.gmra.mxu0 %v796
  %v864 = vpop.f32.mrf.mxu0
  %v865 = vadd.f32 0.0, %v864
  %v866 = vpop.f32.mrf.mxu0
  %867 = vdwg.mxu0
  %v868 = vadd.f32 %v791, %v865
  %v869 = vxor.u32 %v868, 2147483648
  %v870 = vmul.f32 %v869, 1.442695
  %v871 = vpow.pop %v870
  %v872 = vadd.f32 %v871, 1.0
  %v873 = vrcp.pop %v872
  %v874 = vmul.f32 1.0, %v873
  %v875 = vtanh.pop %v868
  %v876 = vmul.f32 %v874, %v777
  %878 = vrot.lane.b32.xlu0 %v875, 64
  %v879 = vpop.permute.xlu0 %878
  %v881 = vmul.f32 %v874, %v879
  %883 = vrot.lane.b32.xlu0 %v881, 32
  %v884 = vpop.permute.xlu0 %883
  %v886 = vadd.f32 %v876, %v884
  %v887 = vtanh.pop %v886
  %889 = vrot.lane.b32.xlu0 %v887, 64
  %v890 = vpop.permute.xlu0 %889
  %v892 = vmul.f32 %v874, %v890
  %894 = vrot.lane.b32.xlu0 %v892, 32
  %v895 = vpop.permute.xlu0 %894
  %s897 = scalar_lea.vmem %s2, 56
  %898 = vst.msk [vmem:[%s897] sm:$0xff] %vm28, %v895
  %899 = vst.msk [vmem:[%s3] sm:$0xff] %vm28, %v895
  %901 = vrot.lane.b32.xlu0 %v886, 96
  %v902 = vpop.permute.xlu0 %901
  %904 = vst.msk [vmem:[%s4] sm:$0xff] %vm28, %v902
  // Predicated region
  $region14: #{encoder_forward.1} parent=0 // pred_check
    _
  $region15: #{encoder_forward.1} parent=0 // pred_check_branch
    %906 = sbr.rel (0) target = $region17
  $region16: #{encoder_forward.1} parent=0 // pred_region
    _
  $region17: #{encoder_forward.1} parent=0 // pred_fallthru
    _
  // Predicated region
  $region18: #{encoder_forward.1} parent=0 // pred_check
    _
  $region19: #{encoder_forward.1} parent=0 // pred_check_branch
    %908 = sbr.rel (0) target = $region21
  $region20: #{encoder_forward.1} parent=0 // pred_region
    _
  $region21: #{encoder_forward.1} parent=0 // pred_fallthru
    _
  // Predicated region
  $region22: #{encoder_forward.1} parent=0 // pred_check
    _
  $region23: #{encoder_forward.1} parent=0 // pred_check_branch
    %910 = sbr.rel (0) target = $region25
  $region24: #{encoder_forward.1} parent=0 // pred_region
    _
  $region25: #{encoder_forward.1} parent=0 // pred_fallthru
    _
  // Predicated region
  $region26: #{encoder_forward.1} parent=0 // pred_check
    _
  $region27: #{encoder_forward.1} parent=0 // pred_check_branch
    %912 = sbr.rel (0) target = $region29
  $region28: #{encoder_forward.1} parent=0 // pred_region
    _
  $region29: #{encoder_forward.1} parent=0 // pred_fallthru
    _
  // Predicated region
  $region30: #{encoder_forward.1} parent=0 // pred_check
    _
  $region31: #{encoder_forward.1} parent=0 // pred_check_branch
    %914 = sbr.rel (0) target = $region33
  $region32: #{encoder_forward.1} parent=0 // pred_region
    _
  $region33: #{encoder_forward.1} parent=0 // pred_fallthru
    _
  // Predicated region
  $region34: #{encoder_forward.1} parent=0 // pred_check
    _
  $region35: #{encoder_forward.1} parent=0 // pred_check_branch
    %916 = sbr.rel (0) target = $region37
  $region36: #{encoder_forward.1} parent=0 // pred_region
    _
  $region37: #{encoder_forward.1} parent=0 // pred_fallthru
    _

</llo_original>
